<compile_context>
chip_gen: v7x
topology: tpu7x:2x2x1
jax: 0.10.0
libtpu: 0.0.40
codegen_flags: <defaults>
</compile_context>

<pallas_src>
import jax
import jax.numpy as jnp
from jax.experimental import pallas as pl
from jax.experimental.pallas import tpu as pltpu

INPUT_DIM = 2
OUTPUT_DIM = 1

_FAST_PATH_MIN_BATCH = 1024   # below this, plain JAX is strictly better
_MAX_LANES = 1024             # lane-axis tile width cap


def _linear_kernel(x_ref, w_ref, b_ref, o_ref):
    # x_ref: (INPUT_DIM, r_tile, C) VMEM -- feature planes over a dense batch slab
    # w_ref: (INPUT_DIM,)  SMEM -- torch-layout weight row (single output unit)
    # b_ref: (OUTPUT_DIM,) SMEM
    # o_ref: (r_tile, C)   VMEM -- lane-dense output slab
    w0 = w_ref[0]
    w1 = w_ref[1]
    b = b_ref[0]
    # Pure VPU: 2 vmul + 2 vadd per vreg, full-width unmasked stores.
    o_ref[...] = (x_ref[0] * w0 + x_ref[1] * w1 + b).astype(o_ref.dtype)


def _pick_row_tile_target():
    """Sublane-block target per chip generation (fits scoped-VMEM defaults)."""
    try:
        kind = jax.devices()[0].device_kind.lower()
    except Exception:
        kind = ""
    # v6e/v7x: 24 MiB double-buffered working set (<= 32 MiB scoped default).
    # v5e / unknown: 12 MiB (<= 16 MiB scoped default).
    return 1024 if ("v6" in kind or "v7" in kind) else 512


def dummy_model_forward(x, weight, bias, *, force_pallas=False):
    """x: (B, INPUT_DIM), weight: (OUTPUT_DIM, INPUT_DIM) torch layout,
    bias: (OUTPUT_DIM,).  Returns (B, OUTPUT_DIM): y = x @ weight.T + bias."""
    assert x.ndim == 2 and x.shape[1] == INPUT_DIM
    assert weight.shape == (OUTPUT_DIM, INPUT_DIM) and bias.shape == (OUTPUT_DIM,)
    B = x.shape[0]
    out_dtype = x.dtype

    # Small-batch fast path: skip Pallas entirely.
    if B < _FAST_PATH_MIN_BATCH and not force_pallas:
        return (x @ weight.T + bias).astype(out_dtype)

    # ---- tile selection ---------------------------------------------------
    # Lane width: multiple of 128, grows with B up to _MAX_LANES (caps padding
    # waste for mid-sized batches instead of power-of-2 rounding).
    C = int(min(_MAX_LANES, max(128, 128 * pl.cdiv(B, 8 * 128))))
    R = int(pl.cdiv(B, C))                                # rows of the batch slab
    r_tile = int(min(_pick_row_tile_target(), pl.cdiv(R, 8) * 8))
    R_pad = int(pl.cdiv(R, r_tile) * r_tile)
    B_pad = R_pad * C

    # ---- layout: batch as a dense (sublane x lane) slab --------------------
    x_pad = x if B_pad == B else jnp.pad(x, ((0, B_pad - B), (0, 0)))
    # One extra HBM pass over x (feature-major transpose); see header note.
    x_slab = x_pad.T.reshape(INPUT_DIM, R_pad, C)

    w_flat = weight.reshape(-1).astype(jnp.float32)       # (INPUT_DIM,), no transpose
    b_flat = bias.reshape(-1).astype(jnp.float32)         # (OUTPUT_DIM,)

    out = pl.pallas_call(
        _linear_kernel,
        out_shape=jax.ShapeDtypeStruct((R_pad, C), out_dtype),
        grid_spec=pltpu.PrefetchScalarGridSpec(
            num_scalar_prefetch=0,
            grid=(R_pad // r_tile,),
            in_specs=[
                # Dense slab: last two dims (r_tile, C) are (8,128)-aligned.
                pl.BlockSpec((INPUT_DIM, r_tile, C), lambda i: (0, i, 0)),
                # Tiny parameters: scalar SMEM, no VMEM tiles / DMAs.
                pl.BlockSpec(memory_space=pltpu.MemorySpace.SMEM),
                pl.BlockSpec(memory_space=pltpu.MemorySpace.SMEM),
            ],
            out_specs=pl.BlockSpec((r_tile, C), lambda i: (i, 0)),
        ),
        compiler_params=pltpu.CompilerParams(
            dimension_semantics=("parallel",)),  # shards across both TCs on v7x
    )(x_slab, w_flat, b_flat)

    # Row-major flatten restores batch order; reshape is a bitcast when B_pad==B.
    y = out.reshape(-1)
    if B_pad != B:
        y = y[:B]
    return y.reshape(B, OUTPUT_DIM)


if __name__ == "__main__":
    key = jax.random.PRNGKey(0)
    k_x, k_w, k_b = jax.random.split(key, 3)

    # PyTorch-style init U(-1/sqrt(fan_in), 1/sqrt(fan_in)).
    bound = 1.0 / (INPUT_DIM ** 0.5)
    weight = jax.random.uniform(k_w, (OUTPUT_DIM, INPUT_DIM),
                                minval=-bound, maxval=bound, dtype=jnp.float32)
    bias = jax.random.uniform(k_b, (OUTPUT_DIM,),
                              minval=-bound, maxval=bound, dtype=jnp.float32)

    # Small batch: exercise the Pallas path explicitly.
    B = 8
    x = jax.random.normal(k_x, (B, INPUT_DIM), dtype=jnp.float32)
    y = dummy_model_forward(x, weight, bias, force_pallas=True)
    jax.block_until_ready(y)
    y_ref = x @ weight.T + bias
    assert y.shape == (B, OUTPUT_DIM)
    assert jnp.allclose(y, y_ref, atol=1e-5, rtol=1e-5)

    # Small batch through the fast path (plain JAX) must match too.
    y_fast = dummy_model_forward(x, weight, bias)
    assert jnp.allclose(y_fast, y_ref, atol=1e-5, rtol=1e-5)

    # Ragged mid-size batch: exercises padding + output-slice path.
    B2 = 3000
    x2 = jax.random.normal(k_x, (B2, INPUT_DIM), dtype=jnp.float32)
    y2 = dummy_model_forward(x2, weight, bias, force_pallas=True)
    jax.block_until_ready(y2)
    assert y2.shape == (B2, OUTPUT_DIM)
    assert jnp.allclose(y2, x2 @ weight.T + bias, atol=1e-5, rtol=1e-5)

    print("KERNEL_OK")
</pallas_src>

<mosaic_0001>
module attributes {stable_mosaic.version = 11 : i64} {
  func.func @_linear_kernel(%arg0: i32, %arg1: memref<2x8x128xf32, #tpu.memory_space<vmem>>, %arg2: memref<2xf32, #tpu.memory_space<smem>>, %arg3: memref<1xf32, #tpu.memory_space<smem>>, %arg4: memref<8x128xf32, #tpu.memory_space<vmem>>) attributes {dimension_semantics = [#tpu.dimension_semantics<parallel>], iteration_bounds = array<i64: 1>, scalar_prefetch = 0 : i64, scratch_operands = 0 : i64, tpu.core_type = #tpu.core_type<tc>, window_params = [{transform_indices = @transform_0, window_bounds = array<i64: 2, 8, 128>}, {transform_indices = @transform_1, window_bounds = array<i64: 2>}, {transform_indices = @transform_2, window_bounds = array<i64: 1>}, {transform_indices = @transform_3, window_bounds = array<i64: 8, 128>}]} {
    %c0 = arith.constant 0 : index
    %0 = memref.load %arg2[%c0] : memref<2xf32, #tpu.memory_space<smem>>
    %c1 = arith.constant 1 : index
    %1 = memref.load %arg2[%c1] : memref<2xf32, #tpu.memory_space<smem>>
    %c0_0 = arith.constant 0 : index
    %2 = memref.load %arg3[%c0_0] : memref<1xf32, #tpu.memory_space<smem>>
    %c0_1 = arith.constant 0 : index
    %c0_2 = arith.constant 0 : index
    %c0_3 = arith.constant 0 : index
    %3 = vector.load %arg1[%c0_1, %c0_2, %c0_3] : memref<2x8x128xf32, #tpu.memory_space<vmem>>, vector<1x8x128xf32>
    %4 = vector.shape_cast %3 : vector<1x8x128xf32> to vector<8x128xf32>
    %5 = vector.broadcast %0 : f32 to vector<8x128xf32>
    %6 = arith.mulf %4, %5 : vector<8x128xf32>
    %c1_4 = arith.constant 1 : index
    %c0_5 = arith.constant 0 : index
    %c0_6 = arith.constant 0 : index
    %7 = vector.load %arg1[%c1_4, %c0_5, %c0_6] : memref<2x8x128xf32, #tpu.memory_space<vmem>>, vector<1x8x128xf32>
    %8 = vector.shape_cast %7 : vector<1x8x128xf32> to vector<8x128xf32>
    %9 = vector.broadcast %1 : f32 to vector<8x128xf32>
    %10 = arith.mulf %8, %9 : vector<8x128xf32>
    %11 = arith.addf %6, %10 : vector<8x128xf32>
    %12 = vector.broadcast %2 : f32 to vector<8x128xf32>
    %13 = arith.addf %11, %12 : vector<8x128xf32>
    %c0_7 = arith.constant 0 : index
    %c0_8 = arith.constant 0 : index
    %14 = vector.load %arg4[%c0_7, %c0_8] : memref<8x128xf32, #tpu.memory_space<vmem>>, vector<8x128xf32>
    tpu.vector_store %arg4[%c0_7, %c0_8], %13 {strides = array<i32>} : memref<8x128xf32, #tpu.memory_space<vmem>>, vector<8x128xf32>,
    return
  }
  func.func @transform_0(%arg0: i32) -> (i32, i32, i32) {
    %c0_i32 = arith.constant 0 : i32
    %c0_i32_0 = arith.constant 0 : i32
    %c0_i32_1 = arith.constant 0 : i32
    return %c0_i32, %arg0, %c0_i32_0 : i32, i32, i32
  }
  func.func @transform_1(%arg0: i32) -> i32 {
    %c0_i32 = arith.constant 0 : i32
    %c0_i32_0 = arith.constant 0 : i32
    return %c0_i32 : i32
  }
  func.func @transform_2(%arg0: i32) -> i32 {
    %c0_i32 = arith.constant 0 : i32
    %c0_i32_0 = arith.constant 0 : i32
    return %c0_i32 : i32
  }
  func.func @transform_3(%arg0: i32) -> (i32, i32) {
    %c0_i32 = arith.constant 0 : i32
    %c0_i32_0 = arith.constant 0 : i32
    return %arg0, %c0_i32 : i32, i32
  }
}

</mosaic_0001>

<llo_original>
// kernel: tpu_custom_call.1
$region0: #{tpu_custom_call.1}
  #allocation0 [shape = 'u32[]', space=smem, size = 0x4, offset = 0x4, fixed_abs, tag = 'smem constant byte address 0x4 - core index']
  #allocation1 [shape = 'u32[144,128]{1,0:T(1,128)}', space=vmem, size = 0x12000, scoped, tag = 'internal scratch']
  #allocation2 [shape = 'f32[1]{0:T(128)S(6)}', space=smem, size = 0x200, scoped, tag = 'scoped memory for tpu_custom_call.1']
  %s0 = inlined_call_operand.hbm [shape: f32[2,8,128], index: 0, kind: input, shape index: {}]
  %s1 = inlined_call_operand.vmem [shape: f32[2], index: 1, kind: input, shape index: {}]
  %s2 = inlined_call_operand.<no memory space> [shape: f32[1], index: 2, kind: input, shape index: {}]
  %s3 = inlined_call_operand.hbm [shape: f32[8,128], index: 3, kind: output, shape index: {}]
  %s4 = sld [smem:[#allocation0]]
  $region30: #{tpu_custom_call.1} parent=0
    _
  %s6 = ssub.s32 1, %s4
  %s7 = scalar_select 0, %s6, %s4
  %8 = sst [smem:[#allocation2]] %s2
  $region1: #{tpu_custom_call.1} parent=0
    #allocation3 [shape = 'u8[8192]{0}', space=vmem, size = 0x2000, scoped, tag = 'input window, operand 0, single buffered']
    #allocation4 [shape = 's32[1]{0}', space=sflag, size = 0x4, scoped, tag = 'scoped memory for tpu_custom_call.1']
    #allocation5 [shape = 's32[1]{0}', space=sflag, size = 0x4, scoped, tag = 'scoped memory for tpu_custom_call.1']
    #allocation6 [shape = 's32[1]{0}', space=sflag, size = 0x4, scoped, tag = 'scoped memory for tpu_custom_call.1']
    #allocation7 [shape = 'u8[512]{0}', space=smem, size = 0x200, scoped, tag = 'input window, operand 1, single buffered']
    #allocation8 [shape = 'u8[4096]{0}', space=vmem, size = 0x1000, scoped, tag = 'output window, operand 0, single buffered']
    %9 = vsyncpa [#allocation4], 0
    %10 = vsyncpa [#allocation6], 0
    %11 = vsyncpa [#allocation5], 0
    // Predicated region
    $region2: #{tpu_custom_call.1} parent=1 // pred_check
      _
    $region3: #{tpu_custom_call.1} parent=1 // pred_check_branch
      %13 = sbr.rel (0) target = $region5
    $region4: #{tpu_custom_call.1} parent=1 // pred_region
      %s15 = ssub.s32 256, 256
      %16 = vsyncadd [#allocation4], %s15
      %s17 = sshll.u32 [#allocation3], 4
      %s18 = int_to_ptr.vmem [resolvable:$true] %s17
      %23 = dma.hbm_to_vmem [thread:$0]  %s0, 256, %s18, [#allocation4], 128, 128, 8
    $region5: #{tpu_custom_call.1} parent=1 // pred_fallthru
      _
    // Predicated region
    $region6: #{tpu_custom_call.1} parent=1 // pred_check
      _
    $region7: #{tpu_custom_call.1} parent=1 // pred_check_branch
      %25 = sbr.rel (0) target = $region9
    $region8: #{tpu_custom_call.1} parent=1 // pred_region
      %s27 = ssub.s32 16, 16
      %28 = vsyncadd [#allocation6], %s27
      %s30 = sshll.u32 %s1, 4
      %s31 = int_to_ptr.vmem [resolvable:$true] %s30
      %33 = dma.vmem_to_smem %s31, 16, [#allocation7], [#allocation6]
    $region9: #{tpu_custom_call.1} parent=1 // pred_fallthru
      _
    // Predicated region
    $region10: #{tpu_custom_call.1} parent=1 // pred_check
      _
    $region11: #{tpu_custom_call.1} parent=1 // pred_check_branch
      %35 = sbr.rel (0) target = $region13
    $region12: #{tpu_custom_call.1} parent=1 // pred_region
      _
    $region13: #{tpu_custom_call.1} parent=1 // pred_fallthru
      _
    // Predicated region
    $region14: #{tpu_custom_call.1} parent=1 // pred_check
      _
    $region15: #{tpu_custom_call.1} parent=1 // pred_check_branch
      %37 = sbr.rel (0) target = $region17
    $region16: #{tpu_custom_call.1} parent=1 // pred_region
      %38 = dma.done [#allocation4], 256
    $region17: #{tpu_custom_call.1} parent=1 // pred_fallthru
      _
    // Predicated region
    $region18: #{tpu_custom_call.1} parent=1 // pred_check
      _
    $region19: #{tpu_custom_call.1} parent=1 // pred_check_branch
      %40 = sbr.rel (0) target = $region21
    $region20: #{tpu_custom_call.1} parent=1 // pred_region
      %41 = dma.done [#allocation6], 16
    $region21: #{tpu_custom_call.1} parent=1 // pred_fallthru
      _
    %42 = sfence
    %s43 = sld [smem:[#allocation7]]
    %s44 = sld [smem:[#allocation7 + $0x1]]
    %s45 = sld [smem:[#allocation2]]
    %v46 = vld [vmem:[#allocation3] sm:$0xff]
    %v47 = vstv %s43
    %v48 = vmul.f32 %v46, %v47
    %s49 = scalar_lea.vmem [#allocation3], 8
    %v50 = vld [vmem:[%s49] sm:$0xff]
    %v51 = vstv %s44
    %v52 = vmul.f32 %v50, %v51
    %v53 = vadd.f32 %v48, %v52
    %v54 = vstv %s45
    %v55 = vadd.f32 %v53, %v54
    %56 = vst [vmem:[#allocation8] sm:$0xff] %v55
    // Predicated region
    $region22: #{tpu_custom_call.1} parent=1 // pred_check
      _
    $region23: #{tpu_custom_call.1} parent=1 // pred_check_branch
      %58 = sbr.rel (0) target = $region25
    $region24: #{tpu_custom_call.1} parent=1 // pred_region
      %s60 = ssub.s32 128, 128
      %61 = vsyncadd [#allocation5], %s60
      %s63 = sshll.u32 [#allocation8], 4
      %s64 = int_to_ptr.vmem [resolvable:$true] %s63
      %66 = dma.vmem_to_hbm [thread:$0]  %s64, 128, %s3, [#allocation5]
    $region25: #{tpu_custom_call.1} parent=1 // pred_fallthru
      _
    // Predicated region
    $region26: #{tpu_custom_call.1} parent=1 // pred_check
      _
    $region27: #{tpu_custom_call.1} parent=1 // pred_check_branch
      %68 = sbr.rel (0) target = $region29
    $region28: #{tpu_custom_call.1} parent=1 // pred_region
      %69 = dma.done [#allocation5], 128
    $region29: #{tpu_custom_call.1} parent=1 // pred_fallthru
      _
    %70 = vsyncpa [#allocation4], 1
    %71 = vsyncpa [#allocation5], 1
    %72 = vsyncpa [#allocation6], 1

</llo_original>
